<compile_context>
chip_gen: v6e
topology: v6e:2x2x1
jax: 0.10.0
libtpu: 0.0.40
codegen_flags: <defaults>
</compile_context>

<pallas_src>
import functools

import jax
import jax.numpy as jnp
from jax.experimental import pallas as pl
from jax.experimental.pallas import tpu as pltpu


def _mlp_kernel(x_ref, w1_ref, b1_ref, w2_ref, b2_ref, o_ref):
    """Fused MLP tile: out = gelu(x @ W1 + b1) @ W2 + b2  (dropout p=0 is identity)."""
    x = x_ref[...]                                   # (TM, D_in)  bf16
    w1 = w1_ref[...]                                 # (D_in, H)   bf16
    b1 = b1_ref[...]                                 # (1, H)      f32
    w2 = w2_ref[...]                                 # (H, D_out)  bf16
    b2 = b2_ref[...]                                 # (1, D_out)  f32

    # fc1 on the MXU: bf16 operands, f32 accumulation; bias add in f32.
    h = jnp.dot(x, w1, preferred_element_type=jnp.float32) + b1

    # Exact (erf-based) GELU in f32, matching torch.nn.GELU() default.
    h = 0.5 * h * (1.0 + jax.lax.erf(h * jnp.float32(0.7071067811865476)))

    # TODO(synk): dropout with p > 0 would need pltpu.prng_seed/prng_random_bits;
    # the module is constructed with p=0.0 so dropout is the identity here.

    # fc2 on the MXU: cast hidden back to bf16 for the matmul, accumulate f32.
    out = jnp.dot(h.astype(jnp.bfloat16), w2,
                  preferred_element_type=jnp.float32) + b2
    o_ref[...] = out.astype(o_ref.dtype)


def _round_up(n, m):
    return (n + m - 1) // m * m


@functools.partial(jax.jit, static_argnames=("tm",))
def mlp_forward(x, w1, b1, w2, b2, *, tm=256):
    """x: (B, S, D_in) float32 -> (B, S, D_out) float32."""
    B, S, D_in = x.shape
    H = w1.shape[1]
    D_out = w2.shape[1]
    M = B * S

    # Lane-dense / MXU-friendly padded sizes.
    D_in_p = _round_up(D_in, 128)
    H_p = _round_up(H, 128)
    D_out_p = _round_up(D_out, 128)

    # Token-tile size: full `tm` for big inputs, clamped (8-aligned) for small ones
    # so we don't burn MXU cycles and DMA bytes on pure padding.
    tm_eff = min(tm, _round_up(M, 8))
    M_p = _round_up(M, tm_eff)

    # Pad (exact: padded rows/cols contribute zero) and cast matmul operands to bf16.
    x2d = x.reshape(M, D_in)
    x2d = jnp.pad(x2d, ((0, M_p - M), (0, D_in_p - D_in))).astype(jnp.bfloat16)
    w1_p = jnp.pad(w1, ((0, D_in_p - D_in), (0, H_p - H))).astype(jnp.bfloat16)
    w2_p = jnp.pad(w2, ((0, H_p - H), (0, D_out_p - D_out))).astype(jnp.bfloat16)
    b1_p = jnp.pad(b1, (0, H_p - H)).reshape(1, H_p).astype(jnp.float32)
    b2_p = jnp.pad(b2, (0, D_out_p - D_out)).reshape(1, D_out_p).astype(jnp.float32)

    grid = (M_p // tm_eff,)

    # VMEM budget: resident weights/biases + double-buffered x / out tiles
    # + f32 hidden intermediate, with 2x headroom (capped for v7x's 64 MiB/TC).
    resident_bytes = (
        D_in_p * H_p * 2 + H_p * D_out_p * 2            # weights, bf16
        + (H_p + D_out_p) * 4                           # biases, f32
        + 2 * tm_eff * D_in_p * 2                       # x tiles, double-buffered bf16
        + 2 * tm_eff * D_out_p * 4                      # out tiles, double-buffered f32
        + tm_eff * H_p * 4                              # hidden intermediate, f32
    )
    vmem_limit = int(min(max(2 * resident_bytes, 16 * 1024 * 1024),
                         60 * 1024 * 1024))

    out2d = pl.pallas_call(
        _mlp_kernel,
        out_shape=jax.ShapeDtypeStruct((M_p, D_out_p), x.dtype),
        grid_spec=pltpu.PrefetchScalarGridSpec(
            num_scalar_prefetch=0,
            grid=grid,
            in_specs=[
                # Activations: tiled along M, double-buffered by BlockSpec pipelining.
                pl.BlockSpec((tm_eff, D_in_p), lambda i: (i, 0)),
                # Weights / biases: constant index -> VMEM-resident, DMA'd once.
                pl.BlockSpec((D_in_p, H_p), lambda i: (0, 0)),
                pl.BlockSpec((1, H_p), lambda i: (0, 0)),
                pl.BlockSpec((H_p, D_out_p), lambda i: (0, 0)),
                pl.BlockSpec((1, D_out_p), lambda i: (0, 0)),
            ],
            out_specs=pl.BlockSpec((tm_eff, D_out_p), lambda i: (i, 0)),
        ),
        compiler_params=pltpu.CompilerParams(
            # Independent M tiles: shard across v7x's 2 TensorCores.
            dimension_semantics=("parallel",),
            vmem_limit_bytes=vmem_limit,
        ),
    )(x2d, w1_p, b1_p, w2_p, b2_p)

    return out2d[:M, :D_out].reshape(B, S, D_out)


def init_mlp_params(key, in_feature, hidden_feature, out_feature):
    """Deterministic PyTorch-Linear-style init (uniform +/- 1/sqrt(fan_in)).

    Weights returned already transposed to (in, out) for the kernel.
    """
    k1, k2, k3, k4 = jax.random.split(key, 4)
    bound1 = 1.0 / jnp.sqrt(jnp.float32(in_feature))
    bound2 = 1.0 / jnp.sqrt(jnp.float32(hidden_feature))
    w1 = jax.random.uniform(k1, (in_feature, hidden_feature),
                            jnp.float32, -bound1, bound1)
    b1 = jax.random.uniform(k2, (hidden_feature,), jnp.float32, -bound1, bound1)
    w2 = jax.random.uniform(k3, (hidden_feature, out_feature),
                            jnp.float32, -bound2, bound2)
    b2 = jax.random.uniform(k4, (out_feature,), jnp.float32, -bound2, bound2)
    return w1, b1, w2, b2


if __name__ == "__main__":
    # Small ViT-like shapes: batch=2, seq=8, in_feature=32, hidden=64, out=32.
    B, S, D_IN, HIDDEN, D_OUT = 2, 8, 32, 64, 32

    key = jax.random.PRNGKey(0)
    kx, kp = jax.random.split(key)
    x = jax.random.normal(kx, (B, S, D_IN), jnp.float32)
    w1, b1, w2, b2 = init_mlp_params(kp, D_IN, HIDDEN, D_OUT)

    out = mlp_forward(x, w1, b1, w2, b2)
    out = jax.block_until_ready(out)

    # Reference check in plain f32 JAX (erf-based GELU, dropout p=0 is identity).
    # Tolerance ~2e-2 because the kernel uses bf16 matmul operands (f32 accumulation).
    h_ref = jnp.dot(x, w1) + b1
    h_ref = 0.5 * h_ref * (1.0 + jax.lax.erf(h_ref / jnp.sqrt(2.0)))
    ref = jnp.dot(h_ref, w2) + b2
    assert out.shape == (B, S, D_OUT)
    assert jnp.allclose(out, ref, atol=2e-2, rtol=2e-2), (
        float(jnp.max(jnp.abs(out - ref))))

    print("KERNEL_OK")
</pallas_src>

<mosaic_0001>
module attributes {stable_mosaic.version = 11 : i64} {
  func.func @_mlp_kernel(%arg0: i32, %arg1: memref<16x128xbf16, #tpu.memory_space<vmem>>, %arg2: memref<128x128xbf16, #tpu.memory_space<vmem>>, %arg3: memref<1x128xf32, #tpu.memory_space<vmem>>, %arg4: memref<128x128xbf16, #tpu.memory_space<vmem>>, %arg5: memref<1x128xf32, #tpu.memory_space<vmem>>, %arg6: memref<16x128xf32, #tpu.memory_space<vmem>>) attributes {dimension_semantics = [#tpu.dimension_semantics<parallel>], iteration_bounds = array<i64: 1>, scalar_prefetch = 0 : i64, scratch_operands = 0 : i64, tpu.core_type = #tpu.core_type<tc>, window_params = [{transform_indices = @transform_0, window_bounds = array<i64: 16, 128>}, {pipeline_mode = #tpu.pipeline_mode<synchronous>, transform_indices = @transform_1, window_bounds = array<i64: 128, 128>}, {pipeline_mode = #tpu.pipeline_mode<synchronous>, transform_indices = @transform_2, window_bounds = array<i64: 1, 128>}, {pipeline_mode = #tpu.pipeline_mode<synchronous>, transform_indices = @transform_3, window_bounds = array<i64: 128, 128>}, {pipeline_mode = #tpu.pipeline_mode<synchronous>, transform_indices = @transform_4, window_bounds = array<i64: 1, 128>}, {transform_indices = @transform_5, window_bounds = array<i64: 16, 128>}]} {
    %c0 = arith.constant 0 : index
    %c0_0 = arith.constant 0 : index
    %0 = vector.load %arg1[%c0, %c0_0] : memref<16x128xbf16, #tpu.memory_space<vmem>>, vector<16x128xbf16>
    %c0_1 = arith.constant 0 : index
    %c0_2 = arith.constant 0 : index
    %1 = vector.load %arg2[%c0_1, %c0_2] : memref<128x128xbf16, #tpu.memory_space<vmem>>, vector<128x128xbf16>
    %c0_3 = arith.constant 0 : index
    %c0_4 = arith.constant 0 : index
    %2 = vector.load %arg3[%c0_3, %c0_4] : memref<1x128xf32, #tpu.memory_space<vmem>>, vector<1x128xf32>
    %c0_5 = arith.constant 0 : index
    %c0_6 = arith.constant 0 : index
    %3 = vector.load %arg4[%c0_5, %c0_6] : memref<128x128xbf16, #tpu.memory_space<vmem>>, vector<128x128xbf16>
    %c0_7 = arith.constant 0 : index
    %c0_8 = arith.constant 0 : index
    %4 = vector.load %arg5[%c0_7, %c0_8] : memref<1x128xf32, #tpu.memory_space<vmem>>, vector<1x128xf32>
    %cst = arith.constant dense<0.000000e+00> : vector<16x128xf32>
    %5 = tpu.matmul %0, %1, %cst {dimension_numbers = #tpu.dot_dimension_numbers<[1], [0], [0], [1], [0, 0, 1, 1], [], []>} : vector<16x128xbf16>, vector<128x128xbf16>, vector<16x128xf32> -> vector<16x128xf32>
    %6 = vector.broadcast %2 : vector<1x128xf32> to vector<16x128xf32>
    %7 = arith.addf %5, %6 : vector<16x128xf32>
    %cst_9 = arith.constant 5.000000e-01 : f32
    %8 = vector.broadcast %cst_9 : f32 to vector<16x128xf32>
    %9 = arith.mulf %8, %7 : vector<16x128xf32>
    %cst_10 = arith.constant 0.707106769 : f32
    %10 = vector.broadcast %cst_10 : f32 to vector<16x128xf32>
    %11 = arith.mulf %7, %10 : vector<16x128xf32>
    %12 = math.erf %11 : vector<16x128xf32>
    %cst_11 = arith.constant 1.000000e+00 : f32
    %13 = vector.broadcast %cst_11 : f32 to vector<16x128xf32>
    %14 = arith.addf %13, %12 : vector<16x128xf32>
    %15 = arith.mulf %9, %14 : vector<16x128xf32>
    %16 = arith.truncf %15 : vector<16x128xf32> to vector<16x128xbf16>
    %cst_12 = arith.constant dense<0.000000e+00> : vector<16x128xf32>
    %17 = tpu.matmul %16, %3, %cst_12 {dimension_numbers = #tpu.dot_dimension_numbers<[1], [0], [0], [1], [0, 0, 1, 1], [], []>} : vector<16x128xbf16>, vector<128x128xbf16>, vector<16x128xf32> -> vector<16x128xf32>
    %18 = vector.broadcast %4 : vector<1x128xf32> to vector<16x128xf32>
    %19 = arith.addf %17, %18 : vector<16x128xf32>
    %c0_13 = arith.constant 0 : index
    %c0_14 = arith.constant 0 : index
    %20 = vector.load %arg6[%c0_13, %c0_14] : memref<16x128xf32, #tpu.memory_space<vmem>>, vector<16x128xf32>
    tpu.vector_store %arg6[%c0_13, %c0_14], %19 {strides = array<i32>} : memref<16x128xf32, #tpu.memory_space<vmem>>, vector<16x128xf32>,
    return
  }
  func.func @transform_0(%arg0: i32) -> (i32, i32) {
    %c0_i32 = arith.constant 0 : i32
    %c0_i32_0 = arith.constant 0 : i32
    return %arg0, %c0_i32 : i32, i32
  }
  func.func @transform_1(%arg0: i32) -> (i32, i32) {
    %c0_i32 = arith.constant 0 : i32
    %c0_i32_0 = arith.constant 0 : i32
    %c0_i32_1 = arith.constant 0 : i32
    return %c0_i32, %c0_i32_0 : i32, i32
  }
  func.func @transform_2(%arg0: i32) -> (i32, i32) {
    %c0_i32 = arith.constant 0 : i32
    %c0_i32_0 = arith.constant 0 : i32
    %c0_i32_1 = arith.constant 0 : i32
    return %c0_i32, %c0_i32_0 : i32, i32
  }
  func.func @transform_3(%arg0: i32) -> (i32, i32) {
    %c0_i32 = arith.constant 0 : i32
    %c0_i32_0 = arith.constant 0 : i32
    %c0_i32_1 = arith.constant 0 : i32
    return %c0_i32, %c0_i32_0 : i32, i32
  }
  func.func @transform_4(%arg0: i32) -> (i32, i32) {
    %c0_i32 = arith.constant 0 : i32
    %c0_i32_0 = arith.constant 0 : i32
    %c0_i32_1 = arith.constant 0 : i32
    return %c0_i32, %c0_i32_0 : i32, i32
  }
  func.func @transform_5(%arg0: i32) -> (i32, i32) {
    %c0_i32 = arith.constant 0 : i32
    %c0_i32_0 = arith.constant 0 : i32
    return %arg0, %c0_i32 : i32, i32
  }
}

</mosaic_0001>

<llo_original>
// kernel: mlp_forward.1
$region0: #{mlp_forward.1}
  #allocation0 [shape = 'u32[]', space=smem, size = 0x4, offset = 0x4, fixed_abs, tag = 'smem constant byte address 0x4 - core index']
  #allocation1 [shape = 'u32[144,128]{1,0:T(1,128)}', space=vmem, size = 0x12000, scoped, tag = 'internal scratch']
  %s0 = inlined_call_operand.vmem [shape: bf16[16,128], index: 0, kind: input, shape index: {}]
  %s1 = inlined_call_operand.vmem [shape: bf16[128,128], index: 1, kind: input, shape index: {}]
  %s2 = inlined_call_operand.vmem [shape: f32[1,128], index: 2, kind: input, shape index: {}]
  %s3 = inlined_call_operand.vmem [shape: bf16[128,128], index: 3, kind: input, shape index: {}]
  %s4 = inlined_call_operand.vmem [shape: f32[1,128], index: 4, kind: input, shape index: {}]
  %s5 = inlined_call_operand.vmem [shape: f32[16,128], index: 5, kind: output, shape index: {}]
  %s6 = sld [smem:[#allocation0]]
  $region30: #{mlp_forward.1} parent=0
    _
  %s8 = ssub.s32 1, %s6
  %s9 = scalar_select 0, %s8, %s6
  // Predicated region
  $region2: #{mlp_forward.1} parent=0 // pred_check
    _
  $region3: #{mlp_forward.1} parent=0 // pred_check_branch
    %11 = sbr.rel (0) target = $region5
  $region4: #{mlp_forward.1} parent=0 // pred_region
    _
  $region5: #{mlp_forward.1} parent=0 // pred_fallthru
    _
  // Predicated region
  $region6: #{mlp_forward.1} parent=0 // pred_check
    _
  $region7: #{mlp_forward.1} parent=0 // pred_check_branch
    %13 = sbr.rel (0) target = $region9
  $region8: #{mlp_forward.1} parent=0 // pred_region
    _
  $region9: #{mlp_forward.1} parent=0 // pred_fallthru
    _
  // Predicated region
  $region10: #{mlp_forward.1} parent=0 // pred_check
    _
  $region11: #{mlp_forward.1} parent=0 // pred_check_branch
    %15 = sbr.rel (0) target = $region13
  $region12: #{mlp_forward.1} parent=0 // pred_region
    _
  $region13: #{mlp_forward.1} parent=0 // pred_fallthru
    _
  // Predicated region
  $region14: #{mlp_forward.1} parent=0 // pred_check
    _
  $region15: #{mlp_forward.1} parent=0 // pred_check_branch
    %17 = sbr.rel (0) target = $region17
  $region16: #{mlp_forward.1} parent=0 // pred_region
    _
  $region17: #{mlp_forward.1} parent=0 // pred_fallthru
    _
  // Predicated region
  $region18: #{mlp_forward.1} parent=0 // pred_check
    _
  $region19: #{mlp_forward.1} parent=0 // pred_check_branch
    %19 = sbr.rel (0) target = $region21
  $region20: #{mlp_forward.1} parent=0 // pred_region
    _
  $region21: #{mlp_forward.1} parent=0 // pred_fallthru
    _
  %v21 = vld [vmem:[%s0] sm:$0xf]
  %v22 = vld [vmem:[%s0 + $0x4] sm:$0xf]
  %v23 = vld [vmem:[%s1] sm:$0xf]
  %v24 = vld [vmem:[%s1 + $0x4] sm:$0xf]
  %v25 = vld [vmem:[%s1 + $0x8] sm:$0xf]
  %v26 = vld [vmem:[%s1 + $0xc] sm:$0xf]
  %v27 = vld [vmem:[%s1 + $0x10] sm:$0xf]
  %v28 = vld [vmem:[%s1 + $0x14] sm:$0xf]
  %v29 = vld [vmem:[%s1 + $0x18] sm:$0xf]
  %v30 = vld [vmem:[%s1 + $0x1c] sm:$0xf]
  %v31 = vld [vmem:[%s1 + $0x20] sm:$0xf]
  %v32 = vld [vmem:[%s1 + $0x24] sm:$0xf]
  %v33 = vld [vmem:[%s1 + $0x28] sm:$0xf]
  %v34 = vld [vmem:[%s1 + $0x2c] sm:$0xf]
  %v35 = vld [vmem:[%s1 + $0x30] sm:$0xf]
  %v36 = vld [vmem:[%s1 + $0x34] sm:$0xf]
  %v37 = vld [vmem:[%s1 + $0x38] sm:$0xf]
  %v38 = vld [vmem:[%s1 + $0x3c] sm:$0xf]
  %v39 = vld [vmem:[%s2] sm:$0x1]
  %v40 = vld [vmem:[%s3] sm:$0xf]
  %v41 = vld [vmem:[%s3 + $0x4] sm:$0xf]
  %v42 = vld [vmem:[%s3 + $0x8] sm:$0xf]
  %v43 = vld [vmem:[%s3 + $0xc] sm:$0xf]
  %v44 = vld [vmem:[%s3 + $0x10] sm:$0xf]
  %v45 = vld [vmem:[%s3 + $0x14] sm:$0xf]
  %v46 = vld [vmem:[%s3 + $0x18] sm:$0xf]
  %v47 = vld [vmem:[%s3 + $0x1c] sm:$0xf]
  %v48 = vld [vmem:[%s3 + $0x20] sm:$0xf]
  %v49 = vld [vmem:[%s3 + $0x24] sm:$0xf]
  %v50 = vld [vmem:[%s3 + $0x28] sm:$0xf]
  %v51 = vld [vmem:[%s3 + $0x2c] sm:$0xf]
  %v52 = vld [vmem:[%s3 + $0x30] sm:$0xf]
  %v53 = vld [vmem:[%s3 + $0x34] sm:$0xf]
  %v54 = vld [vmem:[%s3 + $0x38] sm:$0xf]
  %v55 = vld [vmem:[%s3 + $0x3c] sm:$0xf]
  %v56 = vld [vmem:[%s4] sm:$0x1]
  %v58 = vlaneseq
  %v59 = vshrl.u32 %v58, 7
  %v60 = vsub.s32 0, %v59
  %v61 = vrot.slane %v39, %v60
  %v65 = vunpack.c.l.b16 %v21
  %v66 = vunpack.c.l.b16 %v22
  %v67 = vpack.c.b16 %v66, %v65
  %v85 = vunpack.c.l.b16 %v23
  %v86 = vunpack.c.l.b16 %v24
  %v87 = vunpack.c.l.b16 %v25
  %v88 = vunpack.c.l.b16 %v26
  %v89 = vunpack.c.l.b16 %v27
  %v90 = vunpack.c.l.b16 %v28
  %v91 = vunpack.c.l.b16 %v29
  %v92 = vunpack.c.l.b16 %v30
  %v93 = vunpack.c.l.b16 %v31
  %v94 = vunpack.c.l.b16 %v32
  %v95 = vunpack.c.l.b16 %v33
  %v96 = vunpack.c.l.b16 %v34
  %v97 = vunpack.c.l.b16 %v35
  %v98 = vunpack.c.l.b16 %v36
  %v99 = vunpack.c.l.b16 %v37
  %v100 = vunpack.c.l.b16 %v38
  %v101 = vpack.c.b16 %v86, %v85
  %v102 = vpack.c.b16 %v88, %v87
  %v103 = vpack.c.b16 %v90, %v89
  %v104 = vpack.c.b16 %v92, %v91
  %v105 = vpack.c.b16 %v94, %v93
  %v106 = vpack.c.b16 %v96, %v95
  %v107 = vpack.c.b16 %v98, %v97
  %v108 = vpack.c.b16 %v100, %v99
  %117 = vmatprep.subr.bf16.mxu0 0
  %118 = vmatpush1.bf16.msra.mxu0 %v108
  %119 = vmatprep.subr.bf16.mxu0 0
  %120 = vmatpush1.bf16.msra.mxu0 %v107
  %121 = vmatprep.subr.bf16.mxu0 0
  %122 = vmatpush1.bf16.msra.mxu0 %v106
  %123 = vmatprep.subr.bf16.mxu0 0
  %124 = vmatpush1.bf16.msra.mxu0 %v105
  %125 = vmatprep.subr.bf16.mxu0 0
  %126 = vmatpush1.bf16.msra.mxu0 %v104
  %127 = vmatprep.subr.bf16.mxu0 0
  %128 = vmatpush1.bf16.msra.mxu0 %v103
  %129 = vmatprep.subr.bf16.mxu0 0
  %130 = vmatpush1.bf16.msra.mxu0 %v102
  %131 = vmatprep.subr.bf16.mxu0 0
  %132 = vmatpush1.bf16.msra.mxu0 %v101
  %133 = vmatprep.subr.bf16.mxu0 0
  %134 = vmatpush2.bf16.msra.mxu0 0
  %135 = vmatprep.subr.bf16.mxu0 0
  %136 = vmatpush2.bf16.msra.mxu0 0
  %137 = vmatprep.subr.bf16.mxu0 0
  %138 = vmatpush2.bf16.msra.mxu0 0
  %139 = vmatprep.subr.bf16.mxu0 0
  %140 = vmatpush2.bf16.msra.mxu0 0
  %141 = vmatprep.subr.bf16.mxu0 0
  %142 = vmatpush2.bf16.msra.mxu0 0
  %143 = vmatprep.subr.bf16.mxu0 0
  %144 = vmatpush2.bf16.msra.mxu0 0
  %145 = vmatprep.subr.bf16.mxu0 0
  %146 = vmatpush2.bf16.msra.mxu0 0
  %147 = vmatprep.subr.bf16.mxu0 0
  %148 = vmatpush2.bf16.msra.mxu0 0
  %149 = vmatprep.mubr.bf16.mxu0 0
  %150 = vmatmul.mubr.bf16.gmra.mxu0 %v67
  %v151 = vpop.f32.mrf.mxu0
  %v152 = vadd.f32 %v61, %v151
  %v153 = vpop.f32.mrf.mxu0
  %v154 = vpop.f32.mrf.mxu0
  %v155 = vadd.f32 %v61, %v154
  %v156 = vpop.f32.mrf.mxu0
  %157 = vdwg.mxu0
  %v158 = vmul.f32 %v152, 0.5
  %v159 = vmul.f32 %v155, 0.5
  %v160 = vmul.f32 %v152, 0.70710677
  %v161 = vmul.f32 %v155, 0.70710677
  %v162 = verf.f32.pop %v160
  %v163 = verf.f32.pop %v161
  %v164 = vadd.f32 %v162, 1.0
  %v165 = vadd.f32 %v163, 1.0
  %v166 = vmul.f32 %v158, %v164
  %v167 = vmul.f32 %v159, %v165
  %v168 = vpack.c.bf16 %v167, %v166
  %v170 = vlaneseq
  %v171 = vshrl.u32 %v170, 7
  %v172 = vsub.s32 0, %v171
  %v173 = vrot.slane %v56, %v172
  %v191 = vunpack.c.l.b16 %v40
  %v192 = vunpack.c.l.b16 %v41
  %v193 = vunpack.c.l.b16 %v42
  %v194 = vunpack.c.l.b16 %v43
  %v195 = vunpack.c.l.b16 %v44
  %v196 = vunpack.c.l.b16 %v45
  %v197 = vunpack.c.l.b16 %v46
  %v198 = vunpack.c.l.b16 %v47
  %v199 = vunpack.c.l.b16 %v48
  %v200 = vunpack.c.l.b16 %v49
  %v201 = vunpack.c.l.b16 %v50
  %v202 = vunpack.c.l.b16 %v51
  %v203 = vunpack.c.l.b16 %v52
  %v204 = vunpack.c.l.b16 %v53
  %v205 = vunpack.c.l.b16 %v54
  %v206 = vunpack.c.l.b16 %v55
  %v207 = vpack.c.b16 %v192, %v191
  %v208 = vpack.c.b16 %v194, %v193
  %v209 = vpack.c.b16 %v196, %v195
  %v210 = vpack.c.b16 %v198, %v197
  %v211 = vpack.c.b16 %v200, %v199
  %v212 = vpack.c.b16 %v202, %v201
  %v213 = vpack.c.b16 %v204, %v203
  %v214 = vpack.c.b16 %v206, %v205
  %223 = vmatprep.subr.bf16.mxu0 0
  %224 = vmatpush1.bf16.msra.mxu0 %v214
  %225 = vmatprep.subr.bf16.mxu0 0
  %226 = vmatpush1.bf16.msra.mxu0 %v213
  %227 = vmatprep.subr.bf16.mxu0 0
  %228 = vmatpush1.bf16.msra.mxu0 %v212
  %229 = vmatprep.subr.bf16.mxu0 0
  %230 = vmatpush1.bf16.msra.mxu0 %v211
  %231 = vmatprep.subr.bf16.mxu0 0
  %232 = vmatpush1.bf16.msra.mxu0 %v210
  %233 = vmatprep.subr.bf16.mxu0 0
  %234 = vmatpush1.bf16.msra.mxu0 %v209
  %235 = vmatprep.subr.bf16.mxu0 0
  %236 = vmatpush1.bf16.msra.mxu0 %v208
  %237 = vmatprep.subr.bf16.mxu0 0
  %238 = vmatpush1.bf16.msra.mxu0 %v207
  %239 = vmatprep.subr.bf16.mxu0 0
  %240 = vmatpush2.bf16.msra.mxu0 0
  %241 = vmatprep.subr.bf16.mxu0 0
  %242 = vmatpush2.bf16.msra.mxu0 0
  %243 = vmatprep.subr.bf16.mxu0 0
  %244 = vmatpush2.bf16.msra.mxu0 0
  %245 = vmatprep.subr.bf16.mxu0 0
  %246 = vmatpush2.bf16.msra.mxu0 0
  %247 = vmatprep.subr.bf16.mxu0 0
  %248 = vmatpush2.bf16.msra.mxu0 0
  %249 = vmatprep.subr.bf16.mxu0 0
  %250 = vmatpush2.bf16.msra.mxu0 0
  %251 = vmatprep.subr.bf16.mxu0 0
  %252 = vmatpush2.bf16.msra.mxu0 0
  %253 = vmatprep.subr.bf16.mxu0 0
  %254 = vmatpush2.bf16.msra.mxu0 0
  %255 = vmatprep.mubr.bf16.mxu0 0
  %256 = vmatmul.mubr.bf16.gmra.mxu0 %v168
  %v257 = vpop.f32.mrf.mxu0
  %v258 = vadd.f32 %v173, %v257
  %v259 = vpop.f32.mrf.mxu0
  %v260 = vpop.f32.mrf.mxu0
  %v261 = vadd.f32 %v173, %v260
  %v262 = vpop.f32.mrf.mxu0
  %263 = vdwg.mxu0
  %264 = vst [vmem:[%s5] sm:$0xff] %v258
  %265 = vst [vmem:[%s5 + $0x8] sm:$0xff] %v261
  // Predicated region
  $region22: #{mlp_forward.1} parent=0 // pred_check
    _
  $region23: #{mlp_forward.1} parent=0 // pred_check_branch
    %267 = sbr.rel (0) target = $region25
  $region24: #{mlp_forward.1} parent=0 // pred_region
    _
  $region25: #{mlp_forward.1} parent=0 // pred_fallthru
    _
  // Predicated region
  $region26: #{mlp_forward.1} parent=0 // pred_check
    _
  $region27: #{mlp_forward.1} parent=0 // pred_check_branch
    %269 = sbr.rel (0) target = $region29
  $region28: #{mlp_forward.1} parent=0 // pred_region
    _
  $region29: #{mlp_forward.1} parent=0 // pred_fallthru
    _

</llo_original>
